<compile_context>
chip_gen: v7x
topology: tpu7x:2x2x1
jax: 0.10.0
libtpu: 0.0.40
codegen_flags: <defaults>
</compile_context>

<pallas_src>
import functools

import jax
import jax.numpy as jnp
from jax import lax
from jax.experimental import pallas as pl
from jax.experimental.pallas import tpu as pltpu

EPS = 1e-5            # nn.BatchNorm2d default
NEG_SLOPE = 0.2       # LeakyReLU(0.2)
VMEM_LIMIT = 48 * 1024 * 1024   # safe on v5e/v6e (128 MiB) and v7x (64 MiB)


def _leaky(x):
    return jnp.where(x >= 0, x, NEG_SLOPE * x)


def _round_up(v, m):
    return ((v + m - 1) // m) * m


# --------------------------- Pallas kernels ---------------------------------

def _stats_kernel(x_ref, w1t_ref, b1_ref, s_ref, a_ref):
    """conv1 + bias + LeakyReLU; per-tile first/second moments of a1.

    x_ref:   (1, Cin, tpix)  f32   (pixels on the lane axis)
    w1t_ref: (ndf, Cin)      bf16
    b1_ref:  (ndf, 1)        f32
    s_ref:   (1, 1, ndf, 1)  f32   sum over pixels of a1
    a_ref:   (1, 1, ndf, ndf) f32  A = a1 @ a1^T
    """
    x = x_ref[0].astype(jnp.bfloat16)                            # (Cin, tpix)
    h1 = jnp.dot(w1t_ref[...], x, preferred_element_type=jnp.float32)
    a1 = _leaky(h1 + b1_ref[...])                                # (ndf, tpix) f32
    # Round to bf16 so the moments match pass 2 (which feeds bf16 a1 to conv2).
    a1_bf = a1.astype(jnp.bfloat16)
    s_ref[0, 0] = jnp.sum(a1_bf.astype(jnp.float32), axis=1, keepdims=True)
    a_ref[0, 0] = lax.dot_general(a1_bf, a1_bf, (((1,), (1,)), ((), ())),
                                  preferred_element_type=jnp.float32)


def _fwd_kernel(x_ref, w1t_ref, b1_ref, w2t_ref, scale_ref, shift_ref, w3_ref,
                o_ref, *, use_sigmoid):
    """Fused per-pixel MLP, channel-major, lane-dense (1, tpix) output row."""
    x = x_ref[0].astype(jnp.bfloat16)                            # (Cin, tpix)
    h1 = jnp.dot(w1t_ref[...], x, preferred_element_type=jnp.float32)
    a1 = _leaky(h1 + b1_ref[...])                                # (ndf, tpix) f32
    h2 = jnp.dot(w2t_ref[...], a1.astype(jnp.bfloat16),
                 preferred_element_type=jnp.float32)             # (C2, tpix) f32
    h2 = _leaky(h2 * scale_ref[...] + shift_ref[...])            # fused BN + LReLU
    o = jnp.sum(h2 * w3_ref[...], axis=0, keepdims=True)         # (1, tpix) f32
    if use_sigmoid:
        o = jax.nn.sigmoid(o)
    o_ref[0] = o


# --------------------------- forward pass -----------------------------------

def pixel_discriminator_forward(x_nchw, params, *, use_sigmoid=False,
                                tile_pixels=4096):
    N, Cin, H, W = x_nchw.shape
    HW = H * W
    M = N * HW

    ndf = params["w1"].shape[1]
    C2 = params["w2"].shape[1]

    # ---- tiling over the pixel (lane) axis ----
    tile_pixels = max(128, _round_up(int(tile_pixels), 128))
    hw128 = _round_up(HW, 128)
    tpix = min(tile_pixels, hw128)
    P = pl.cdiv(hw128, tpix)
    if N * P < 2 and hw128 >= 256:     # keep >= 2 parallel steps for v7x's 2 TCs
        tpix = _round_up(pl.cdiv(hw128, 2), 128)
        P = pl.cdiv(hw128, tpix)
    HWp = P * tpix
    Mp = N * HWp

    # Read NCHW natively: collapsing trailing spatial dims is layout-free;
    # only pad the pixel axis when needed (no transpose, x stays f32 in HBM).
    x3 = x_nchw.astype(jnp.float32).reshape(N, Cin, HW)
    if HWp != HW:
        x3 = jnp.pad(x3, ((0, 0), (0, 0), (0, HWp - HW)))

    # channel-major weights
    w1t = params["w1"].T.astype(jnp.bfloat16)                # (ndf, Cin)
    b1c = params["b1"].reshape(ndf, 1).astype(jnp.float32)   # (ndf, 1)
    w2t = params["w2"].T.astype(jnp.bfloat16)                # (C2, ndf)
    w3c = params["w3"].reshape(C2, 1).astype(jnp.float32)    # (C2, 1)

    cparams = pltpu.CompilerParams(
        dimension_semantics=("parallel", "parallel"),
        vmem_limit_bytes=VMEM_LIMIT)

    # ---- pass 1: a1 moments for the BatchNorm batch statistics ----
    cost1 = pl.CostEstimate(
        flops=2 * Mp * ndf * (Cin + ndf),
        transcendentals=0,
        bytes_accessed=Mp * Cin * 4 + N * P * (ndf * ndf + ndf) * 4)
    s_parts, a_parts = pl.pallas_call(
        _stats_kernel,
        out_shape=(jax.ShapeDtypeStruct((N, P, ndf, 1), jnp.float32),
                   jax.ShapeDtypeStruct((N, P, ndf, ndf), jnp.float32)),
        grid=(N, P),
        in_specs=[pl.BlockSpec((1, Cin, tpix), lambda n, p: (n, 0, p)),
                  pl.BlockSpec((ndf, Cin), lambda n, p: (0, 0)),
                  pl.BlockSpec((ndf, 1), lambda n, p: (0, 0))],
        out_specs=(pl.BlockSpec((1, 1, ndf, 1), lambda n, p: (n, p, 0, 0)),
                   pl.BlockSpec((1, 1, ndf, ndf), lambda n, p: (n, p, 0, 0))),
        compiler_params=cparams,
        cost_estimate=cost1,
    )(x3, w1t, b1c)

    # Host-side (tiny): reduce partials, subtract the closed-form pad
    # contribution, derive mean/var of h2 = w2^T a1 algebraically.
    sum_a1 = jnp.sum(s_parts, axis=(0, 1))[:, 0]             # (ndf,)
    A = jnp.sum(a_parts, axis=(0, 1))                        # (ndf, ndf)
    n_pad = N * (HWp - HW)
    if n_pad:
        a1_pad = _leaky(params["b1"].astype(jnp.float32))
        a1_pad = a1_pad.astype(jnp.bfloat16).astype(jnp.float32)
        sum_a1 = sum_a1 - n_pad * a1_pad
        A = A - n_pad * jnp.outer(a1_pad, a1_pad)
    mean_a1 = sum_a1 / M
    Ahat = A / M
    w2t_f = w2t.astype(jnp.float32)                          # bf16-rounded w2^T
    mean_h2 = w2t_f @ mean_a1                                # (C2,)
    e2_h2 = jnp.sum((w2t_f @ Ahat) * w2t_f, axis=1)          # (C2,)  E[h2^2]
    # NOTE: E[x^2]-E[x]^2 in f32; for very large M use centered/Kahan partials.
    var = jnp.maximum(e2_h2 - mean_h2 * mean_h2, 0.0)        # biased variance
    scale = params["gamma"].astype(jnp.float32) * lax.rsqrt(var + EPS)
    shift = params["beta"].astype(jnp.float32) - mean_h2 * scale

    # ---- pass 2: fully fused forward, lane-dense output ----
    cost2 = pl.CostEstimate(
        flops=2 * Mp * (Cin * ndf + ndf * C2 + C2),
        transcendentals=Mp if use_sigmoid else 0,
        bytes_accessed=Mp * Cin * 4 + Mp * 4)
    out = pl.pallas_call(
        functools.partial(_fwd_kernel, use_sigmoid=use_sigmoid),
        out_shape=jax.ShapeDtypeStruct((N, 1, HWp), jnp.float32),
        grid=(N, P),
        in_specs=[pl.BlockSpec((1, Cin, tpix), lambda n, p: (n, 0, p)),
                  pl.BlockSpec((ndf, Cin), lambda n, p: (0, 0)),
                  pl.BlockSpec((ndf, 1), lambda n, p: (0, 0)),
                  pl.BlockSpec((C2, ndf), lambda n, p: (0, 0)),
                  pl.BlockSpec((C2, 1), lambda n, p: (0, 0)),
                  pl.BlockSpec((C2, 1), lambda n, p: (0, 0)),
                  pl.BlockSpec((C2, 1), lambda n, p: (0, 0))],
        out_specs=pl.BlockSpec((1, 1, tpix), lambda n, p: (n, 0, p)),
        compiler_params=cparams,
        cost_estimate=cost2,
    )(x3, w1t, b1c, w2t,
      scale.reshape(C2, 1).astype(jnp.float32),
      shift.reshape(C2, 1).astype(jnp.float32),
      w3c)

    # output is already channel-major NC(HW): crop pad and reshape, no transpose
    return out[:, :, :HW].reshape(N, 1, H, W)


# --------------------------- reference & params ------------------------------

def _reference_forward(x, params, use_sigmoid=False):
    N, Cin, H, W = x.shape
    xp = jnp.transpose(x, (0, 2, 3, 1)).reshape(-1, Cin)
    h1 = _leaky(xp @ params["w1"] + params["b1"])
    h2 = h1 @ params["w2"]
    mean = jnp.mean(h2, axis=0)
    var = jnp.mean((h2 - mean) ** 2, axis=0)                 # biased, training BN
    h2 = _leaky((h2 - mean) * lax.rsqrt(var + EPS) * params["gamma"]
                + params["beta"])
    o = h2 @ params["w3"]
    if use_sigmoid:
        o = jax.nn.sigmoid(o)
    return jnp.transpose(o.reshape(N, H, W, 1), (0, 3, 1, 2))


def init_params(key, input_nc, ndf):
    k1, k2, k3, k4, k5, k6 = jax.random.split(key, 6)
    c2 = 2 * ndf
    return {
        "w1": 0.05 * jax.random.normal(k1, (input_nc, ndf), jnp.float32),
        "b1": 0.05 * jax.random.normal(k2, (ndf,), jnp.float32),
        "w2": 0.05 * jax.random.normal(k3, (ndf, c2), jnp.float32),
        "gamma": 1.0 + 0.1 * jax.random.normal(k4, (c2,), jnp.float32),
        "beta": 0.1 * jax.random.normal(k5, (c2,), jnp.float32),
        "w3": 0.05 * jax.random.normal(k6, (c2, 1), jnp.float32),
    }


# ------------------------------- main ----------------------------------------

if __name__ == "__main__":
    key = jax.random.PRNGKey(0)
    kp, kx = jax.random.split(key)

    # small but architecture-consistent config
    input_nc, ndf = 4, 16
    N, H, W = 2, 16, 16

    params = init_params(kp, input_nc, ndf)
    x = jax.random.normal(kx, (N, input_nc, H, W), jnp.float32)

    fwd = jax.jit(functools.partial(pixel_discriminator_forward,
                                    use_sigmoid=False, tile_pixels=4096))
    out = fwd(x, params)
    jax.block_until_ready(out)

    assert out.shape == (N, 1, H, W), out.shape
    assert bool(jnp.all(jnp.isfinite(out)))

    ref = _reference_forward(x, params, use_sigmoid=False)
    err = float(jnp.max(jnp.abs(out - ref)))
    assert err < 1e-1, f"max abs diff vs reference: {err}"   # bf16 MXU tolerance
    print("KERNEL_OK")
</pallas_src>

<mosaic_0001>
module attributes {stable_mosaic.version = 11 : i64} {
  func.func @_stats_kernel(%arg0: i32, %arg1: i32, %arg2: memref<1x4x256xf32, #tpu.memory_space<vmem>>, %arg3: memref<16x4xbf16, #tpu.memory_space<vmem>>, %arg4: memref<16x1xf32, #tpu.memory_space<vmem>>, %arg5: memref<1x1x16x1xf32, #tpu.memory_space<vmem>>, %arg6: memref<1x1x16x16xf32, #tpu.memory_space<vmem>>) attributes {dimension_semantics = [#tpu.dimension_semantics<parallel>, #tpu.dimension_semantics<parallel>], iteration_bounds = array<i64: 2, 1>, scalar_prefetch = 0 : i64, scratch_operands = 0 : i64, tpu.core_type = #tpu.core_type<tc>, window_params = [{transform_indices = @transform_0, window_bounds = array<i64: 1, 4, 256>}, {pipeline_mode = #tpu.pipeline_mode<synchronous>, transform_indices = @transform_1, window_bounds = array<i64: 16, 4>}, {pipeline_mode = #tpu.pipeline_mode<synchronous>, transform_indices = @transform_2, window_bounds = array<i64: 16, 1>}, {transform_indices = @transform_3, window_bounds = array<i64: 1, 1, 16, 1>}, {transform_indices = @transform_4, window_bounds = array<i64: 1, 1, 16, 16>}]} {
    %c0 = arith.constant 0 : index
    %c0_0 = arith.constant 0 : index
    %c0_1 = arith.constant 0 : index
    %0 = vector.load %arg2[%c0, %c0_0, %c0_1] : memref<1x4x256xf32, #tpu.memory_space<vmem>>, vector<1x4x256xf32>
    %1 = vector.shape_cast %0 : vector<1x4x256xf32> to vector<4x256xf32>
    %2 = arith.truncf %1 : vector<4x256xf32> to vector<4x256xbf16>
    %c0_2 = arith.constant 0 : index
    %c0_3 = arith.constant 0 : index
    %3 = vector.load %arg3[%c0_2, %c0_3] : memref<16x4xbf16, #tpu.memory_space<vmem>>, vector<16x4xbf16>
    %cst = arith.constant dense<0.000000e+00> : vector<16x256xf32>
    %4 = tpu.matmul %3, %2, %cst {dimension_numbers = #tpu.dot_dimension_numbers<[1], [0], [0], [1], [0, 0, 1, 1], [], []>} : vector<16x4xbf16>, vector<4x256xbf16>, vector<16x256xf32> -> vector<16x256xf32>
    %c0_4 = arith.constant 0 : index
    %c0_5 = arith.constant 0 : index
    %5 = vector.load %arg4[%c0_4, %c0_5] : memref<16x1xf32, #tpu.memory_space<vmem>>, vector<16x1xf32>
    %6 = vector.broadcast %5 : vector<16x1xf32> to vector<16x256xf32>
    %7 = arith.addf %4, %6 : vector<16x256xf32>
    %cst_6 = arith.constant 0.000000e+00 : f32
    %8 = vector.broadcast %cst_6 : f32 to vector<16x256xf32>
    %9 = arith.cmpf oge, %7, %8 : vector<16x256xf32>
    %cst_7 = arith.constant 2.000000e-01 : f32
    %10 = vector.broadcast %cst_7 : f32 to vector<16x256xf32>
    %11 = arith.mulf %10, %7 : vector<16x256xf32>
    %12 = arith.select %9, %7, %11 : vector<16x256xi1>, vector<16x256xf32>
    %13 = arith.truncf %12 : vector<16x256xf32> to vector<16x256xbf16>
    %14 = arith.extf %13 : vector<16x256xbf16> to vector<16x256xf32>
    %cst_8 = arith.constant dense<0.000000e+00> : vector<16xf32>
    %15 = vector.multi_reduction <add>, %14, %cst_8 [1] : vector<16x256xf32> to vector<16xf32>
    %16 = vector.shape_cast %15 : vector<16xf32> to vector<16x1xf32>
    %c0_9 = arith.constant 0 : index
    %c0_10 = arith.constant 0 : index
    %c0_11 = arith.constant 0 : index
    %c0_12 = arith.constant 0 : index
    %17 = vector.load %arg5[%c0_9, %c0_10, %c0_11, %c0_12] : memref<1x1x16x1xf32, #tpu.memory_space<vmem>>, vector<1x1x16x1xf32>
    %18 = vector.shape_cast %17 : vector<1x1x16x1xf32> to vector<16x1xf32>
    %19 = vector.shape_cast %16 : vector<16x1xf32> to vector<1x1x16x1xf32>
    tpu.vector_store %arg5[%c0_9, %c0_10, %c0_11, %c0_12], %19 {strides = array<i32>} : memref<1x1x16x1xf32, #tpu.memory_space<vmem>>, vector<1x1x16x1xf32>,
    %cst_13 = arith.constant dense<0.000000e+00> : vector<16x16xf32>
    %20 = tpu.matmul %13, %13, %cst_13 {dimension_numbers = #tpu.dot_dimension_numbers<[1], [1], [0], [0], [0, 0, 1, 0], [], []>} : vector<16x256xbf16>, vector<16x256xbf16>, vector<16x16xf32> -> vector<16x16xf32>
    %c0_14 = arith.constant 0 : index
    %c0_15 = arith.constant 0 : index
    %c0_16 = arith.constant 0 : index
    %c0_17 = arith.constant 0 : index
    %21 = vector.load %arg6[%c0_14, %c0_15, %c0_16, %c0_17] : memref<1x1x16x16xf32, #tpu.memory_space<vmem>>, vector<1x1x16x16xf32>
    %22 = vector.shape_cast %21 : vector<1x1x16x16xf32> to vector<16x16xf32>
    %23 = vector.shape_cast %20 : vector<16x16xf32> to vector<1x1x16x16xf32>
    tpu.vector_store %arg6[%c0_14, %c0_15, %c0_16, %c0_17], %23 {strides = array<i32>} : memref<1x1x16x16xf32, #tpu.memory_space<vmem>>, vector<1x1x16x16xf32>,
    return
  }
  func.func @transform_0(%arg0: i32, %arg1: i32) -> (i32, i32, i32) {
    %c0_i32 = arith.constant 0 : i32
    %c0_i32_0 = arith.constant 0 : i32
    return %arg0, %c0_i32, %arg1 : i32, i32, i32
  }
  func.func @transform_1(%arg0: i32, %arg1: i32) -> (i32, i32) {
    %c0_i32 = arith.constant 0 : i32
    %c0_i32_0 = arith.constant 0 : i32
    %c0_i32_1 = arith.constant 0 : i32
    return %c0_i32, %c0_i32_0 : i32, i32
  }
  func.func @transform_2(%arg0: i32, %arg1: i32) -> (i32, i32) {
    %c0_i32 = arith.constant 0 : i32
    %c0_i32_0 = arith.constant 0 : i32
    %c0_i32_1 = arith.constant 0 : i32
    return %c0_i32, %c0_i32_0 : i32, i32
  }
  func.func @transform_3(%arg0: i32, %arg1: i32) -> (i32, i32, i32, i32) {
    %c0_i32 = arith.constant 0 : i32
    %c0_i32_0 = arith.constant 0 : i32
    %c0_i32_1 = arith.constant 0 : i32
    return %arg0, %arg1, %c0_i32, %c0_i32_0 : i32, i32, i32, i32
  }
  func.func @transform_4(%arg0: i32, %arg1: i32) -> (i32, i32, i32, i32) {
    %c0_i32 = arith.constant 0 : i32
    %c0_i32_0 = arith.constant 0 : i32
    %c0_i32_1 = arith.constant 0 : i32
    return %arg0, %arg1, %c0_i32, %c0_i32_0 : i32, i32, i32, i32
  }
}

module attributes {stable_mosaic.version = 11 : i64} {
  func.func @_fwd_kernel(%arg0: i32, %arg1: i32, %arg2: memref<1x4x256xf32, #tpu.memory_space<vmem>>, %arg3: memref<16x4xbf16, #tpu.memory_space<vmem>>, %arg4: memref<16x1xf32, #tpu.memory_space<vmem>>, %arg5: memref<32x16xbf16, #tpu.memory_space<vmem>>, %arg6: memref<32x1xf32, #tpu.memory_space<vmem>>, %arg7: memref<32x1xf32, #tpu.memory_space<vmem>>, %arg8: memref<32x1xf32, #tpu.memory_space<vmem>>, %arg9: memref<1x1x256xf32, #tpu.memory_space<vmem>>) attributes {dimension_semantics = [#tpu.dimension_semantics<parallel>, #tpu.dimension_semantics<parallel>], iteration_bounds = array<i64: 2, 1>, scalar_prefetch = 0 : i64, scratch_operands = 0 : i64, tpu.core_type = #tpu.core_type<tc>, window_params = [{transform_indices = @transform_0, window_bounds = array<i64: 1, 4, 256>}, {pipeline_mode = #tpu.pipeline_mode<synchronous>, transform_indices = @transform_1, window_bounds = array<i64: 16, 4>}, {pipeline_mode = #tpu.pipeline_mode<synchronous>, transform_indices = @transform_2, window_bounds = array<i64: 16, 1>}, {pipeline_mode = #tpu.pipeline_mode<synchronous>, transform_indices = @transform_3, window_bounds = array<i64: 32, 16>}, {pipeline_mode = #tpu.pipeline_mode<synchronous>, transform_indices = @transform_4, window_bounds = array<i64: 32, 1>}, {pipeline_mode = #tpu.pipeline_mode<synchronous>, transform_indices = @transform_5, window_bounds = array<i64: 32, 1>}, {pipeline_mode = #tpu.pipeline_mode<synchronous>, transform_indices = @transform_6, window_bounds = array<i64: 32, 1>}, {transform_indices = @transform_7, window_bounds = array<i64: 1, 1, 256>}]} {
    %c0 = arith.constant 0 : index
    %c0_0 = arith.constant 0 : index
    %c0_1 = arith.constant 0 : index
    %0 = vector.load %arg2[%c0, %c0_0, %c0_1] : memref<1x4x256xf32, #tpu.memory_space<vmem>>, vector<1x4x256xf32>
    %1 = vector.shape_cast %0 : vector<1x4x256xf32> to vector<4x256xf32>
    %2 = arith.truncf %1 : vector<4x256xf32> to vector<4x256xbf16>
    %c0_2 = arith.constant 0 : index
    %c0_3 = arith.constant 0 : index
    %3 = vector.load %arg3[%c0_2, %c0_3] : memref<16x4xbf16, #tpu.memory_space<vmem>>, vector<16x4xbf16>
    %cst = arith.constant dense<0.000000e+00> : vector<16x256xf32>
    %4 = tpu.matmul %3, %2, %cst {dimension_numbers = #tpu.dot_dimension_numbers<[1], [0], [0], [1], [0, 0, 1, 1], [], []>} : vector<16x4xbf16>, vector<4x256xbf16>, vector<16x256xf32> -> vector<16x256xf32>
    %c0_4 = arith.constant 0 : index
    %c0_5 = arith.constant 0 : index
    %5 = vector.load %arg4[%c0_4, %c0_5] : memref<16x1xf32, #tpu.memory_space<vmem>>, vector<16x1xf32>
    %6 = vector.broadcast %5 : vector<16x1xf32> to vector<16x256xf32>
    %7 = arith.addf %4, %6 : vector<16x256xf32>
    %cst_6 = arith.constant 0.000000e+00 : f32
    %8 = vector.broadcast %cst_6 : f32 to vector<16x256xf32>
    %9 = arith.cmpf oge, %7, %8 : vector<16x256xf32>
    %cst_7 = arith.constant 2.000000e-01 : f32
    %10 = vector.broadcast %cst_7 : f32 to vector<16x256xf32>
    %11 = arith.mulf %10, %7 : vector<16x256xf32>
    %12 = arith.select %9, %7, %11 : vector<16x256xi1>, vector<16x256xf32>
    %c0_8 = arith.constant 0 : index
    %c0_9 = arith.constant 0 : index
    %13 = vector.load %arg5[%c0_8, %c0_9] : memref<32x16xbf16, #tpu.memory_space<vmem>>, vector<32x16xbf16>
    %14 = arith.truncf %12 : vector<16x256xf32> to vector<16x256xbf16>
    %cst_10 = arith.constant dense<0.000000e+00> : vector<32x256xf32>
    %15 = tpu.matmul %13, %14, %cst_10 {dimension_numbers = #tpu.dot_dimension_numbers<[1], [0], [0], [1], [0, 0, 1, 1], [], []>} : vector<32x16xbf16>, vector<16x256xbf16>, vector<32x256xf32> -> vector<32x256xf32>
    %c0_11 = arith.constant 0 : index
    %c0_12 = arith.constant 0 : index
    %16 = vector.load %arg6[%c0_11, %c0_12] : memref<32x1xf32, #tpu.memory_space<vmem>>, vector<32x1xf32>
    %17 = vector.broadcast %16 : vector<32x1xf32> to vector<32x256xf32>
    %18 = arith.mulf %15, %17 : vector<32x256xf32>
    %c0_13 = arith.constant 0 : index
    %c0_14 = arith.constant 0 : index
    %19 = vector.load %arg7[%c0_13, %c0_14] : memref<32x1xf32, #tpu.memory_space<vmem>>, vector<32x1xf32>
    %20 = vector.broadcast %19 : vector<32x1xf32> to vector<32x256xf32>
    %21 = arith.addf %18, %20 : vector<32x256xf32>
    %cst_15 = arith.constant 0.000000e+00 : f32
    %22 = vector.broadcast %cst_15 : f32 to vector<32x256xf32>
    %23 = arith.cmpf oge, %21, %22 : vector<32x256xf32>
    %cst_16 = arith.constant 2.000000e-01 : f32
    %24 = vector.broadcast %cst_16 : f32 to vector<32x256xf32>
    %25 = arith.mulf %24, %21 : vector<32x256xf32>
    %26 = arith.select %23, %21, %25 : vector<32x256xi1>, vector<32x256xf32>
    %c0_17 = arith.constant 0 : index
    %c0_18 = arith.constant 0 : index
    %27 = vector.load %arg8[%c0_17, %c0_18] : memref<32x1xf32, #tpu.memory_space<vmem>>, vector<32x1xf32>
    %28 = vector.broadcast %27 : vector<32x1xf32> to vector<32x256xf32>
    %29 = arith.mulf %26, %28 : vector<32x256xf32>
    %cst_19 = arith.constant dense<0.000000e+00> : vector<256xf32>
    %30 = vector.multi_reduction <add>, %29, %cst_19 [0] : vector<32x256xf32> to vector<256xf32>
    %31 = vector.shape_cast %30 : vector<256xf32> to vector<1x256xf32>
    %c0_20 = arith.constant 0 : index
    %c0_21 = arith.constant 0 : index
    %c0_22 = arith.constant 0 : index
    %32 = vector.load %arg9[%c0_20, %c0_21, %c0_22] : memref<1x1x256xf32, #tpu.memory_space<vmem>>, vector<1x1x256xf32>
    %33 = vector.shape_cast %32 : vector<1x1x256xf32> to vector<1x256xf32>
    %34 = vector.shape_cast %31 : vector<1x256xf32> to vector<1x1x256xf32>
    tpu.vector_store %arg9[%c0_20, %c0_21, %c0_22], %34 {strides = array<i32>} : memref<1x1x256xf32, #tpu.memory_space<vmem>>, vector<1x1x256xf32>,
    return
  }
  func.func @transform_0(%arg0: i32, %arg1: i32) -> (i32, i32, i32) {
    %c0_i32 = arith.constant 0 : i32
    %c0_i32_0 = arith.constant 0 : i32
    return %arg0, %c0_i32, %arg1 : i32, i32, i32
  }
  func.func @transform_1(%arg0: i32, %arg1: i32) -> (i32, i32) {
    %c0_i32 = arith.constant 0 : i32
    %c0_i32_0 = arith.constant 0 : i32
    %c0_i32_1 = arith.constant 0 : i32
    return %c0_i32, %c0_i32_0 : i32, i32
  }
  func.func @transform_2(%arg0: i32, %arg1: i32) -> (i32, i32) {
    %c0_i32 = arith.constant 0 : i32
    %c0_i32_0 = arith.constant 0 : i32
    %c0_i32_1 = arith.constant 0 : i32
    return %c0_i32, %c0_i32_0 : i32, i32
  }
  func.func @transform_3(%arg0: i32, %arg1: i32) -> (i32, i32) {
    %c0_i32 = arith.constant 0 : i32
    %c0_i32_0 = arith.constant 0 : i32
    %c0_i32_1 = arith.constant 0 : i32
    return %c0_i32, %c0_i32_0 : i32, i32
  }
  func.func @transform_4(%arg0: i32, %arg1: i32) -> (i32, i32) {
    %c0_i32 = arith.constant 0 : i32
    %c0_i32_0 = arith.constant 0 : i32
    %c0_i32_1 = arith.constant 0 : i32
    return %c0_i32, %c0_i32_0 : i32, i32
  }
  func.func @transform_5(%arg0: i32, %arg1: i32) -> (i32, i32) {
    %c0_i32 = arith.constant 0 : i32
    %c0_i32_0 = arith.constant 0 : i32
    %c0_i32_1 = arith.constant 0 : i32
    return %c0_i32, %c0_i32_0 : i32, i32
  }
  func.func @transform_6(%arg0: i32, %arg1: i32) -> (i32, i32) {
    %c0_i32 = arith.constant 0 : i32
    %c0_i32_0 = arith.constant 0 : i32
    %c0_i32_1 = arith.constant 0 : i32
    return %c0_i32, %c0_i32_0 : i32, i32
  }
  func.func @transform_7(%arg0: i32, %arg1: i32) -> (i32, i32, i32) {
    %c0_i32 = arith.constant 0 : i32
    %c0_i32_0 = arith.constant 0 : i32
    return %arg0, %c0_i32, %arg1 : i32, i32, i32
  }
}

</mosaic_0001>

<llo_original>
// kernel: pixel_discriminator_forward.2
$region0: #{pixel_discriminator_forward.2}
  #allocation0 [shape = 'u32[]', space=smem, size = 0x4, offset = 0x4, fixed_abs, tag = 'smem constant byte address 0x4 - core index']
  #allocation1 [shape = 'u32[144,128]{1,0:T(1,128)}', space=vmem, size = 0x12000, scoped, tag = 'internal scratch']
  %s0 = inlined_call_operand.vmem [shape: f32[2,4,256], index: 0, kind: input, shape index: {}]
  %s1 = inlined_call_operand.vmem [shape: bf16[16,4], index: 1, kind: input, shape index: {}]
  %s2 = inlined_call_operand.vmem [shape: f32[16,1], index: 2, kind: input, shape index: {}]
  %s3 = inlined_call_operand.vmem [shape: f32[2,1,16,1], index: 3, kind: output, shape index: {0}]
  %s4 = inlined_call_operand.vmem [shape: f32[2,1,16,16], index: 4, kind: output, shape index: {1}]
  %5 = xla_tuple %s3, %s4
  %s6 = sld [smem:[#allocation0]]
  $region53: #{pixel_discriminator_forward.2} parent=0
    _
  %s8 = ssub.s32 1, %s6
  %s9 = scalar_select 0, %s8, %s6
  loop: start=0, step=1, limit=4
  $region2: #{pixel_discriminator_forward.2} parent=0 // loop_pre_header
    _
  $region3: #{pixel_discriminator_forward.2} parent=0 // loop_header
    %s11 = sphi 0, %s15
    %p12 = scmp.ge.s32.totalorder %s11, 4
    %s18 = sphi 0, %s30
    %s19 = sphi 0, %s26
    %s20 = sphi 0, %s18
    %s21 = sphi 0, %s19
    %s22 = sphi 0, %s20
    %s23 = sphi 0, %s21
    %s35 = sphi 0, %s37
    %s38 = sphi 0, %s35
    %s39 = sphi 0, %s38
    %s55 = sphi 0, %s39
    %s59 = sphi 0, %s59
    %s61 = sphi 0, %s59
    %s62 = sphi 0, %s61
    %s76 = sphi 0, %s62
    %s80 = sphi 0, %s80
    %s82 = sphi 0, %s80
    %s83 = sphi 0, %s82
    %s97 = sphi 0, %s83
    %s105 = sphi 0, %s107
    %s108 = sphi 0, %s105
    %s109 = sphi 0, %s108
    %s125 = sphi 0, %s109
    %s133 = sphi 0, %s135
    %s136 = sphi 0, %s133
    %s137 = sphi 0, %s136
    %s153 = sphi 0, %s137
  $region4: #{pixel_discriminator_forward.2} parent=0 // loop_header_branch
    %14 = sbr.rel (%p12) target = $region8
  $region5: #{pixel_discriminator_forward.2} parent=0 // loop_body
    %s16 = ssub.s32 %s11, 1
    %s17 = ssub.s32 %s11, 2
    %s24 = sadd.s32 1, %s19
    %p25 = scmp.ge.s32.totalorder %s24, 1
    %s26 = scalar_select %p25, 0, %s24
    %s27 = sadd.s32 1, %s18
    %s28 = scalar_select %p25, %s27, %s18
    %p29 = scmp.ge.s32.totalorder %s28, 2
    %s30 = scalar_select %p29, 0, %s28
    %s31 = ssub.s32 %s18, %s30
    %s32 = ssub.s32 %s19, %s26
    %s33 = sor.u32 %s31, %s32
    %p34 = scmp.eq.s32.totalorder %s33, 0
    %s36 = sadd.s32 %s35, 1
    %s37 = scalar_select %p34, %s35, %s36
    %p40 = pneg %p34
    %p41 = scmp.eq.s32.totalorder %s11, 1
    %p42 = por %p40, %p41
    %p43 = scmp.ne.s32.totalorder %s35, %s38
    %p44 = scmp.eq.s32.totalorder %s11, 0
    %p45 = por %p43, %p44
    %p46 = scmp.ne.s32.totalorder %s35, %s38
    %p47 = scmp.eq.s32.totalorder %s16, 1
    %p48 = por %p46, %p47
    %p49 = scmp.ne.s32.totalorder %s38, %s39
    %p50 = scmp.eq.s32.totalorder %s16, 0
    %p51 = por %p49, %p50
    %p52 = scmp.ne.s32.totalorder %s38, %s39
    %p53 = scmp.eq.s32.totalorder %s17, 1
    %p54 = por %p52, %p53
    %p56 = scmp.ne.s32.totalorder %s39, %s55
    %p57 = scmp.eq.s32.totalorder %s17, 0
    %p58 = por %p56, %p57
    %s60 = sadd.s32 %s59, 1
    %p63 = scmp.eq.s32.totalorder %s11, 1
    %p64 = scmp.ne.s32.totalorder %s59, %s61
    %p65 = scmp.eq.s32.totalorder %s11, 0
    %p66 = por %p64, %p65
    %p67 = scmp.ne.s32.totalorder %s59, %s61
    %p68 = scmp.eq.s32.totalorder %s16, 1
    %p69 = por %p67, %p68
    %p70 = scmp.ne.s32.totalorder %s61, %s62
    %p71 = scmp.eq.s32.totalorder %s16, 0
    %p72 = por %p70, %p71
    %p73 = scmp.ne.s32.totalorder %s61, %s62
    %p74 = scmp.eq.s32.totalorder %s17, 1
    %p75 = por %p73, %p74
    %p77 = scmp.ne.s32.totalorder %s62, %s76
    %p78 = scmp.eq.s32.totalorder %s17, 0
    %p79 = por %p77, %p78
    %s81 = sadd.s32 %s80, 1
    %p84 = scmp.eq.s32.totalorder %s11, 1
    %p85 = scmp.ne.s32.totalorder %s80, %s82
    %p86 = scmp.eq.s32.totalorder %s11, 0
    %p87 = por %p85, %p86
    %p88 = scmp.ne.s32.totalorder %s80, %s82
    %p89 = scmp.eq.s32.totalorder %s16, 1
    %p90 = por %p88, %p89
    %p91 = scmp.ne.s32.totalorder %s82, %s83
    %p92 = scmp.eq.s32.totalorder %s16, 0
    %p93 = por %p91, %p92
    %p94 = scmp.ne.s32.totalorder %s82, %s83
    %p95 = scmp.eq.s32.totalorder %s17, 1
    %p96 = por %p94, %p95
    %p98 = scmp.ne.s32.totalorder %s83, %s97
    %p99 = scmp.eq.s32.totalorder %s17, 0
    %p100 = por %p98, %p99
    %s101 = ssub.s32 %s18, %s30
    %s102 = ssub.s32 %s19, %s26
    %s103 = sor.u32 %s101, %s102
    %p104 = scmp.eq.s32.totalorder %s103, 0
    %s106 = sadd.s32 %s105, 1
    %s107 = scalar_select %p104, %s105, %s106
    %p110 = pneg %p104
    %p111 = scmp.eq.s32.totalorder %s11, 1
    %p112 = por %p110, %p111
    %p113 = scmp.ne.s32.totalorder %s105, %s108
    %p114 = scmp.eq.s32.totalorder %s11, 0
    %p115 = por %p113, %p114
    %p116 = scmp.ne.s32.totalorder %s105, %s108
    %p117 = scmp.eq.s32.totalorder %s16, 1
    %p118 = por %p116, %p117
    %p119 = scmp.ne.s32.totalorder %s108, %s109
    %p120 = scmp.eq.s32.totalorder %s16, 0
    %p121 = por %p119, %p120
    %p122 = scmp.ne.s32.totalorder %s108, %s109
    %p123 = scmp.eq.s32.totalorder %s17, 1
    %p124 = por %p122, %p123
    %p126 = scmp.ne.s32.totalorder %s109, %s125
    %p127 = scmp.eq.s32.totalorder %s17, 0
    %p128 = por %p126, %p127
    %s129 = ssub.s32 %s18, %s30
    %s130 = ssub.s32 %s19, %s26
    %s131 = sor.u32 %s129, %s130
    %p132 = scmp.eq.s32.totalorder %s131, 0
    %s134 = sadd.s32 %s133, 1
    %s135 = scalar_select %p132, %s133, %s134
    %p138 = pneg %p132
    %p139 = scmp.eq.s32.totalorder %s11, 1
    %p140 = por %p138, %p139
    %p141 = scmp.ne.s32.totalorder %s133, %s136
    %p142 = scmp.eq.s32.totalorder %s11, 0
    %p143 = por %p141, %p142
    %p144 = scmp.ne.s32.totalorder %s133, %s136
    %p145 = scmp.eq.s32.totalorder %s16, 1
    %p146 = por %p144, %p145
    %p147 = scmp.ne.s32.totalorder %s136, %s137
    %p148 = scmp.eq.s32.totalorder %s16, 0
    %p149 = por %p147, %p148
    %p150 = scmp.ne.s32.totalorder %s136, %s137
    %p151 = scmp.eq.s32.totalorder %s17, 1
    %p152 = por %p150, %p151
    %p154 = scmp.ne.s32.totalorder %s137, %s153
    %p155 = scmp.eq.s32.totalorder %s17, 0
    %p156 = por %p154, %p155
    %p157 = scmp.le.s32.totalorder 1, %s11
    %p158 = scmp.lt.s32.totalorder %s11, 3
    %p159 = pnand %p157, %p158
    %p160 = pneg %p159
    // Predicated region
    $region9: #{pixel_discriminator_forward.2} parent=5 // pred_check
      _
    $region10: #{pixel_discriminator_forward.2} parent=5 // pred_check_branch
      %162 = sbr.rel (%p159) target = $region12
    $region11: #{pixel_discriminator_forward.2} parent=5 // pred_region
      %s163 = ssub.s32 %s11, 1
      // Predicated region
      $region13: #{pixel_discriminator_forward.2} parent=11 // pred_check
        %p164 = pneg %p72
      $region14: #{pixel_discriminator_forward.2} parent=11 // pred_check_branch
        %166 = sbr.rel (%p164) target = $region16
      $region15: #{pixel_discriminator_forward.2} parent=11 // pred_region
        _
      $region16: #{pixel_discriminator_forward.2} parent=11 // pred_fallthru
        _
      // Predicated region
      $region17: #{pixel_discriminator_forward.2} parent=11 // pred_check
        %p167 = pneg %p93
      $region18: #{pixel_discriminator_forward.2} parent=11 // pred_check_branch
        %169 = sbr.rel (%p167) target = $region20
      $region19: #{pixel_discriminator_forward.2} parent=11 // pred_region
        _
      $region20: #{pixel_discriminator_forward.2} parent=11 // pred_fallthru
        _
    $region12: #{pixel_discriminator_forward.2} parent=5 // pred_fallthru
      _
    %p170 = scmp.lt.s32.totalorder %s11, 2
    // Predicated region
    $region21: #{pixel_discriminator_forward.2} parent=5 // pred_check
      %p171 = pneg %p170
    $region22: #{pixel_discriminator_forward.2} parent=5 // pred_check_branch
      %173 = sbr.rel (%p171) target = $region24
    $region23: #{pixel_discriminator_forward.2} parent=5 // pred_region
      // Predicated region
      $region25: #{pixel_discriminator_forward.2} parent=23 // pred_check
        %p174 = pneg %p45
      $region26: #{pixel_discriminator_forward.2} parent=23 // pred_check_branch
        %176 = sbr.rel (%p174) target = $region28
      $region27: #{pixel_discriminator_forward.2} parent=23 // pred_region
        %s177 = smul.u32 2, %s19
        %p178 = scmp.lt.s32.totalorder %s18, 1
        %s179 = scalar_select %p178, %s18, 1
        %p180 = scmp.lt.s32.totalorder %s177, 1
        %s181 = scalar_select %p180, %s177, 1
        %s182 = smul.addr %s179, 2
        %s183 = sadd.s32 %s181, %s182
        %s184 = smul.addr %s183, 4
        %s185 = scalar_lea.vmem %s0, %s184
        %s186 = smul.u32 2, %s19
      $region28: #{pixel_discriminator_forward.2} parent=23 // pred_fallthru
        _
    $region24: #{pixel_discriminator_forward.2} parent=5 // pred_fallthru
      _
    %p187 = scmp.le.s32.totalorder 1, %s11
    %p188 = scmp.lt.s32.totalorder %s11, 3
    %p189 = pnand %p187, %p188
    %p190 = pneg %p189
    // Predicated region
    $region29: #{pixel_discriminator_forward.2} parent=5 // pred_check
      _
    $region30: #{pixel_discriminator_forward.2} parent=5 // pred_check_branch
      %192 = sbr.rel (%p189) target = $region32
    $region31: #{pixel_discriminator_forward.2} parent=5 // pred_region
      %s193 = ssub.s32 %s11, 1
      %s194 = smul.u32 2, %s21
      %p195 = scmp.lt.s32.totalorder %s20, 1
      %s196 = scalar_select %p195, %s20, 1
      %p197 = scmp.lt.s32.totalorder %s194, 1
      %s198 = scalar_select %p197, %s194, 1
      %s199 = smul.addr %s196, 2
      %s200 = sadd.s32 %s198, %s199
      %s201 = smul.addr %s200, 4
      %s202 = scalar_lea.vmem %s0, %s201
      %p203 = pneg %p51
      %p204 = pneg %p48
      %p205 = pneg %p72
      %p206 = pneg %p69
      %p207 = pneg %p93
      %p208 = pneg %p90
      %p209 = pneg %p121
      %p210 = pneg %p118
      %p211 = scmp.lt.s32.totalorder %s20, 1
      %s212 = scalar_select %p211, %s20, 1
      %p213 = scmp.lt.s32.totalorder %s21, 0
      %s214 = scalar_select %p213, %s21, 0
      %s215 = smul.addr %s214, 2
      %s216 = smul.addr %s212, 2
      %s217 = sadd.s32 %s215, %s216
      %s218 = smul.addr %s217, 8
      %s219 = scalar_lea.vmem %s3, %s218
      %p220 = pneg %p149
      %p221 = pneg %p146
      %p222 = scmp.lt.s32.totalorder %s20, 1
      %s223 = scalar_select %p222, %s20, 1
      %p224 = scmp.lt.s32.totalorder %s21, 0
      %s225 = scalar_select %p224, %s21, 0
      %s226 = smul.addr %s225, 2
      %s227 = smul.addr %s223, 2
      %s228 = sadd.s32 %s226, %s227
      %s229 = smul.addr %s228, 8
      %s230 = scalar_lea.vmem %s4, %s229
      %s231 = smul.u32 2, %s21
      %p232 = scmp.lt.s32.totalorder %s20, 1
      %s233 = scalar_select %p232, %s20, 1
      %p234 = scmp.lt.s32.totalorder %s231, 1
      %s235 = scalar_select %p234, %s231, 1
      %s236 = smul.addr %s233, 2
      %s237 = sadd.s32 %s235, %s236
      %s238 = smul.addr %s237, 4
      %s239 = scalar_lea.vmem %s0, %s238
      %s240 = smul.u32 2, %s21
      %p241 = scmp.lt.s32.totalorder %s20, 1
      %s242 = scalar_select %p241, %s20, 1
      %p243 = scmp.lt.s32.totalorder %s21, 0
      %s244 = scalar_select %p243, %s21, 0
      %s245 = smul.addr %s244, 2
      %s246 = smul.addr %s242, 2
      %s247 = sadd.s32 %s245, %s246
      %s248 = smul.addr %s247, 8
      %s249 = scalar_lea.vmem %s3, %s248
      %p250 = scmp.lt.s32.totalorder %s20, 1
      %s251 = scalar_select %p250, %s20, 1
      %p252 = scmp.lt.s32.totalorder %s21, 0
      %s253 = scalar_select %p252, %s21, 0
      %s254 = smul.addr %s253, 2
      %s255 = smul.addr %s251, 2
      %s256 = sadd.s32 %s254, %s255
      %s257 = smul.addr %s256, 8
      %s258 = scalar_lea.vmem %s4, %s257
      %v260 = vld [vmem:[%s239] sm:$0xff]
      %v262 = vcombine.high %v260, %v260
      %v264 = vpack.c.bf16 %v260, %v260
      %v265 = vpack.c.bf16 %v262, %v262
      %v266 = vld [vmem:[%s1] sm:$0xf]
      %v267 = vld [vmem:[%s1 + $0x4] sm:$0xf]
      %v268 = vld [vmem:[%s2] sm:$0xff]
      %v269 = vld [vmem:[%s2 + $0x8] sm:$0xff]
      %271 = vset.pattern.permute.xlu0 0
      %272 = vperm.xlu0 %271, %v268
      %v273 = vpop.permute.xlu0 %272
      %276 = vset.pattern.permute.xlu0 0
      %277 = vperm.xlu0 %276, %v269
      %v278 = vpop.permute.xlu0 %277
      %v282 = vunpack.c.l.b16 %v266
      %v283 = vunpack.c.l.b16 %v267
      %v284 = vpack.c.b16 %v283, %v282
      %vm285 = vcmask 31744
      %v287 = vsel %vm285, %v284, 0
      %vm289 = vcmask 1041408
      %v291 = vsel %vm289, %v264, 0
      %v294 = vsel %vm289, %v265, 0
      %296 = vmatprep.subr.bf16.mxu0 %v294
      %297 = vmatpush1.bf16.msra.mxu0 %v291
      %298 = vmatprep.subr.bf16.mxu0 0
      %299 = vmatpush1.bf16.msra.mxu0 0
      %300 = vmatprep.subr.bf16.mxu0 0
      %301 = vmatpush1.bf16.msra.mxu0 0
      %302 = vmatprep.subr.bf16.mxu0 0
      %303 = vmatpush1.bf16.msra.mxu0 0
      %304 = vmatprep.subr.bf16.mxu0 0
      %305 = vmatpush1.bf16.msra.mxu0 0
      %306 = vmatprep.subr.bf16.mxu0 0
      %307 = vmatpush1.bf16.msra.mxu0 0
      %308 = vmatprep.subr.bf16.mxu0 0
      %309 = vmatpush1.bf16.msra.mxu0 0
      %310 = vmatprep.subr.bf16.mxu0 0
      %311 = vmatpush1.bf16.msra.mxu0 0
      %312 = vmatprep.subr.bf16.mxu0 0
      %313 = vmatpush1.bf16.msra.mxu0 0
      %314 = vmatprep.subr.bf16.mxu0 0
      %315 = vmatpush1.bf16.msra.mxu0 0
      %316 = vmatprep.subr.bf16.mxu0 0
      %317 = vmatpush1.bf16.msra.mxu0 0
      %318 = vmatprep.subr.bf16.mxu0 0
      %319 = vmatpush1.bf16.msra.mxu0 0
      %320 = vmatprep.subr.bf16.mxu0 0
      %321 = vmatpush1.bf16.msra.mxu0 0
      %322 = vmatprep.subr.bf16.mxu0 0
      %323 = vmatpush1.bf16.msra.mxu0 0
      %324 = vmatprep.subr.bf16.mxu0 0
      %325 = vmatpush1.bf16.msra.mxu0 0
      %326 = vmatprep.subr.bf16.mxu0 0
      %327 = vmatpush1.bf16.msra.mxu0 0
      %328 = vmatprep.mubr.bf16.mxu0 0
      %329 = vmatmul.mubr.bf16.gmra.mrb[0].mxu0 %v287
      %v330 = vpop.f32.mrb[0].mxu0
      %v331 = vadd.f32 %v273, %v330
      %v332 = vpop.f32.mrb[0].mxu0
      %v333 = vadd.f32 %v273, %v332
      %v334 = vpop.f32.mrb[0].mxu0
      %v335 = vadd.f32 %v278, %v334
      %v336 = vpop.f32.mrb[0].mxu0
      %v337 = vadd.f32 %v278, %v336
      %338 = vdwg.mxu0
      %vm339 = vcmp.ge.f32.partialorder %v331, 0.0
      %vm340 = vcmp.ge.f32.partialorder %v333, 0.0
      %vm341 = vcmp.ge.f32.partialorder %v335, 0.0
      %vm342 = vcmp.ge.f32.partialorder %v337, 0.0
      %v343 = vmul.f32 %v331, 0.2
      %v344 = vmul.f32 %v333, 0.2
      %v345 = vmul.f32 %v335, 0.2
      %v346 = vmul.f32 %v337, 0.2
      %v347 = vsel %vm339, %v331, %v343
      %v348 = vsel %vm340, %v333, %v344
      %v349 = vsel %vm341, %v335, %v345
      %v350 = vsel %vm342, %v337, %v346
      %v351 = vpack.c.bf16 %v349, %v347
      %v352 = vpack.c.bf16 %v350, %v348
      %v353 = vunpack.c.l.bf16 %v351
      %v354 = vunpack.c.l.bf16 %v352
      %v355 = vunpack.c.h.bf16 %v351
      %v356 = vunpack.c.h.bf16 %v352
      %v357 = vadd.f32 %v353, %v354
      %358 = vadd.xlane.f32.xlu0 %v357
      %v359 = vpop.xlane.xlu0 %358
      %v360 = vadd.f32 %v355, %v356
      %361 = vadd.xlane.f32.xlu0 %v360
      %v362 = vpop.xlane.xlu0 %361
      %vm363 = vcmask 7168
      %364 = vst.msk [vmem:[%s249] sm:$0xff] %vm363, %v359
      %365 = vst.msk [vmem:[%s249 + $0x8] sm:$0xff] %vm363, %v362
      %366 = vmatprep.subr.bf16.mxu0 %v352
      %367 = vmatpush1.bf16.xpose.msra.mxu0 %v351
      %368 = vmatprep.subr.bf16.mxu0 0
      %369 = vmatpush1.bf16.xpose.msra.mxu0 0
      %370 = vmatprep.subr.bf16.mxu0 0
      %371 = vmatpush1.bf16.xpose.msra.mxu0 0
      %372 = vmatprep.subr.bf16.mxu0 0
      %373 = vmatpush1.bf16.xpose.msra.mxu0 0
      %374 = vmatprep.subr.bf16.mxu0 0
      %375 = vmatpush1.bf16.xpose.msra.mxu0 0
      %376 = vmatprep.subr.bf16.mxu0 0
      %377 = vmatpush1.bf16.xpose.msra.mxu0 0
      %378 = vmatprep.subr.bf16.mxu0 0
      %379 = vmatpush1.bf16.xpose.msra.mxu0 0
      %380 = vmatprep.subr.bf16.mxu0 0
      %381 = vmatpush1.bf16.xpose.msra.mxu0 0
      %382 = vmatprep.subr.bf16.mxu0 0
      %383 = vmatpush1.bf16.xpose.msra.mxu0 0
      %384 = vmatprep.subr.bf16.mxu0 0
      %385 = vmatpush1.bf16.xpose.msra.mxu0 0
      %386 = vmatprep.subr.bf16.mxu0 0
      %387 = vmatpush1.bf16.xpose.msra.mxu0 0
      %388 = vmatprep.subr.bf16.mxu0 0
      %389 = vmatpush1.bf16.xpose.msra.mxu0 0
      %390 = vmatprep.subr.bf16.mxu0 0
      %391 = vmatpush1.bf16.xpose.msra.mxu0 0
      %392 = vmatprep.subr.bf16.mxu0 0
      %393 = vmatpush1.bf16.xpose.msra.mxu0 0
      %394 = vmatprep.subr.bf16.mxu0 0
      %395 = vmatpush1.bf16.xpose.msra.mxu0 0
      %396 = vmatprep.subr.bf16.mxu0 0
      %397 = vmatpush1.bf16.xpose.msra.mxu0 0
      %398 = vmatprep.mubr.bf16.mxu0 %v352
      %399 = vmatmul.mubr.bf16.gmra.mrb[0].mxu0 %v351
      %v400 = vpop.f32.mrb[0].mxu0
      %v401 = vadd.f32 0.0, %v400
      %v402 = vpop.f32.mrb[0].mxu0
      %v403 = vpop.f32.mrb[0].mxu0
      %v404 = vadd.f32 0.0, %v403
      %v405 = vpop.f32.mrb[0].mxu0
      %406 = vdwg.mxu0
      %vm407 = vcmask 130048
      %408 = vst.msk [vmem:[%s258] sm:$0xff] %vm407, %v401
      %409 = vst.msk [vmem:[%s258 + $0x8] sm:$0xff] %vm407, %v404
      %p410 = scmp.lt.s32.totalorder %s20, 1
      %s411 = scalar_select %p410, %s20, 1
      %p412 = scmp.lt.s32.totalorder %s21, 0
      %s413 = scalar_select %p412, %s21, 0
      %s414 = smul.addr %s413, 2
      %s415 = smul.addr %s411, 2
      %s416 = sadd.s32 %s414, %s415
      %s417 = smul.addr %s416, 8
      %s418 = scalar_lea.vmem %s3, %s417
      %p419 = scmp.lt.s32.totalorder %s20, 1
      %s420 = scalar_select %p419, %s20, 1
      %p421 = scmp.lt.s32.totalorder %s21, 0
      %s422 = scalar_select %p421, %s21, 0
      %s423 = smul.addr %s422, 2
      %s424 = smul.addr %s420, 2
      %s425 = sadd.s32 %s423, %s424
      %s426 = smul.addr %s425, 8
      %s427 = scalar_lea.vmem %s4, %s426
      // Predicated region
      $region33: #{pixel_discriminator_forward.2} parent=31 // pred_check
        %p428 = pneg %p118
      $region34: #{pixel_discriminator_forward.2} parent=31 // pred_check_branch
        %430 = sbr.rel (%p428) target = $region36
      $region35: #{pixel_discriminator_forward.2} parent=31 // pred_region
        _
      $region36: #{pixel_discriminator_forward.2} parent=31 // pred_fallthru
        _
      // Predicated region
      $region37: #{pixel_discriminator_forward.2} parent=31 // pred_check
        %p431 = pneg %p146
      $region38: #{pixel_discriminator_forward.2} parent=31 // pred_check_branch
        %433 = sbr.rel (%p431) target = $region40
      $region39: #{pixel_discriminator_forward.2} parent=31 // pred_region
        _
      $region40: #{pixel_discriminator_forward.2} parent=31 // pred_fallthru
        _
    $region32: #{pixel_discriminator_forward.2} parent=5 // pred_fallthru
      _
    %p434 = scmp.le.s32.totalorder 2, %s11
    // Predicated region
    $region41: #{pixel_discriminator_forward.2} parent=5 // pred_check
      %p435 = pneg %p434
    $region42: #{pixel_discriminator_forward.2} parent=5 // pred_check_branch
      %437 = sbr.rel (%p435) target = $region44
    $region43: #{pixel_discriminator_forward.2} parent=5 // pred_region
      %s438 = ssub.s32 %s11, 2
      // Predicated region
      $region45: #{pixel_discriminator_forward.2} parent=43 // pred_check
        %p439 = pneg %p124
      $region46: #{pixel_discriminator_forward.2} parent=43 // pred_check_branch
        %441 = sbr.rel (%p439) target = $region48
      $region47: #{pixel_discriminator_forward.2} parent=43 // pred_region
        %p442 = scmp.lt.s32.totalorder %s22, 1
        %s443 = scalar_select %p442, %s22, 1
        %p444 = scmp.lt.s32.totalorder %s23, 0
        %s445 = scalar_select %p444, %s23, 0
        %s446 = smul.addr %s445, 2
        %s447 = smul.addr %s443, 2
        %s448 = sadd.s32 %s446, %s447
        %s449 = smul.addr %s448, 8
        %s450 = scalar_lea.vmem %s3, %s449
      $region48: #{pixel_discriminator_forward.2} parent=43 // pred_fallthru
        _
      // Predicated region
      $region49: #{pixel_discriminator_forward.2} parent=43 // pred_check
        %p451 = pneg %p152
      $region50: #{pixel_discriminator_forward.2} parent=43 // pred_check_branch
        %453 = sbr.rel (%p451) target = $region52
      $region51: #{pixel_discriminator_forward.2} parent=43 // pred_region
        %p454 = scmp.lt.s32.totalorder %s22, 1
        %s455 = scalar_select %p454, %s22, 1
        %p456 = scmp.lt.s32.totalorder %s23, 0
        %s457 = scalar_select %p456, %s23, 0
        %s458 = smul.addr %s457, 2
        %s459 = smul.addr %s455, 2
        %s460 = sadd.s32 %s458, %s459
        %s461 = smul.addr %s460, 8
        %s462 = scalar_lea.vmem %s4, %s461
      $region52: #{pixel_discriminator_forward.2} parent=43 // pred_fallthru
        _
    $region44: #{pixel_discriminator_forward.2} parent=5 // pred_fallthru
      _
  $region6: #{pixel_discriminator_forward.2} parent=0 // loop_footer
    %s15 = sadd.s32 1, %s11
  $region7: #{pixel_discriminator_forward.2} parent=0 // loop_footer_branch
    %10 = sbr.rel target = $region3
  $region8: #{pixel_discriminator_forward.2} parent=0 // loop_exit
    _

// kernel: pixel_discriminator_forward.3
$region0: #{pixel_discriminator_forward.3}
  #allocation0 [shape = 'u32[]', space=smem, size = 0x4, offset = 0x4, fixed_abs, tag = 'smem constant byte address 0x4 - core index']
  #allocation1 [shape = 'u32[144,128]{1,0:T(1,128)}', space=vmem, size = 0x12000, scoped, tag = 'internal scratch']
  %s0 = inlined_call_operand.vmem [shape: f32[2,4,256], index: 0, kind: input, shape index: {}]
  %s1 = inlined_call_operand.vmem [shape: bf16[16,4], index: 1, kind: input, shape index: {}]
  %s2 = inlined_call_operand.vmem [shape: f32[16,1], index: 2, kind: input, shape index: {}]
  %s3 = inlined_call_operand.vmem [shape: bf16[32,16], index: 3, kind: input, shape index: {}]
  %s4 = inlined_call_operand.vmem [shape: f32[32,1], index: 4, kind: input, shape index: {}]
  %s5 = inlined_call_operand.vmem [shape: f32[32,1], index: 5, kind: input, shape index: {}]
  %s6 = inlined_call_operand.vmem [shape: f32[32,1], index: 6, kind: input, shape index: {}]
  %s7 = inlined_call_operand.vmem [shape: f32[2,1,256], index: 7, kind: output, shape index: {}]
  %s8 = sld [smem:[#allocation0]]
  $region61: #{pixel_discriminator_forward.3} parent=0
    _
  %s10 = ssub.s32 1, %s8
  %s11 = scalar_select 0, %s10, %s8
  loop: start=0, step=1, limit=4
  $region2: #{pixel_discriminator_forward.3} parent=0 // loop_pre_header
    _
  $region3: #{pixel_discriminator_forward.3} parent=0 // loop_header
    %s13 = sphi 0, %s17
    %p14 = scmp.ge.s32.totalorder %s13, 4
    %s20 = sphi 0, %s32
    %s21 = sphi 0, %s28
    %s22 = sphi 0, %s20
    %s23 = sphi 0, %s21
    %s24 = sphi 0, %s22
    %s25 = sphi 0, %s23
    %s37 = sphi 0, %s39
    %s40 = sphi 0, %s37
    %s41 = sphi 0, %s40
    %s57 = sphi 0, %s41
    %s61 = sphi 0, %s61
    %s63 = sphi 0, %s61
    %s64 = sphi 0, %s63
    %s78 = sphi 0, %s64
    %s82 = sphi 0, %s82
    %s84 = sphi 0, %s82
    %s85 = sphi 0, %s84
    %s99 = sphi 0, %s85
    %s103 = sphi 0, %s103
    %s105 = sphi 0, %s103
    %s106 = sphi 0, %s105
    %s120 = sphi 0, %s106
    %s124 = sphi 0, %s124
    %s126 = sphi 0, %s124
    %s127 = sphi 0, %s126
    %s141 = sphi 0, %s127
    %s145 = sphi 0, %s145
    %s147 = sphi 0, %s145
    %s148 = sphi 0, %s147
    %s162 = sphi 0, %s148
    %s166 = sphi 0, %s166
    %s168 = sphi 0, %s166
    %s169 = sphi 0, %s168
    %s183 = sphi 0, %s169
    %s191 = sphi 0, %s193
    %s194 = sphi 0, %s191
    %s195 = sphi 0, %s194
    %s211 = sphi 0, %s195
  $region4: #{pixel_discriminator_forward.3} parent=0 // loop_header_branch
    %16 = sbr.rel (%p14) target = $region8
  $region5: #{pixel_discriminator_forward.3} parent=0 // loop_body
    %s18 = ssub.s32 %s13, 1
    %s19 = ssub.s32 %s13, 2
    %s26 = sadd.s32 1, %s21
    %p27 = scmp.ge.s32.totalorder %s26, 1
    %s28 = scalar_select %p27, 0, %s26
    %s29 = sadd.s32 1, %s20
    %s30 = scalar_select %p27, %s29, %s20
    %p31 = scmp.ge.s32.totalorder %s30, 2
    %s32 = scalar_select %p31, 0, %s30
    %s33 = ssub.s32 %s20, %s32
    %s34 = ssub.s32 %s21, %s28
    %s35 = sor.u32 %s33, %s34
    %p36 = scmp.eq.s32.totalorder %s35, 0
    %s38 = sadd.s32 %s37, 1
    %s39 = scalar_select %p36, %s37, %s38
    %p42 = pneg %p36
    %p43 = scmp.eq.s32.totalorder %s13, 1
    %p44 = por %p42, %p43
    %p45 = scmp.ne.s32.totalorder %s37, %s40
    %p46 = scmp.eq.s32.totalorder %s13, 0
    %p47 = por %p45, %p46
    %p48 = scmp.ne.s32.totalorder %s37, %s40
    %p49 = scmp.eq.s32.totalorder %s18, 1
    %p50 = por %p48, %p49
    %p51 = scmp.ne.s32.totalorder %s40, %s41
    %p52 = scmp.eq.s32.totalorder %s18, 0
    %p53 = por %p51, %p52
    %p54 = scmp.ne.s32.totalorder %s40, %s41
    %p55 = scmp.eq.s32.totalorder %s19, 1
    %p56 = por %p54, %p55
    %p58 = scmp.ne.s32.totalorder %s41, %s57
    %p59 = scmp.eq.s32.totalorder %s19, 0
    %p60 = por %p58, %p59
    %s62 = sadd.s32 %s61, 1
    %p65 = scmp.eq.s32.totalorder %s13, 1
    %p66 = scmp.ne.s32.totalorder %s61, %s63
    %p67 = scmp.eq.s32.totalorder %s13, 0
    %p68 = por %p66, %p67
    %p69 = scmp.ne.s32.totalorder %s61, %s63
    %p70 = scmp.eq.s32.totalorder %s18, 1
    %p71 = por %p69, %p70
    %p72 = scmp.ne.s32.totalorder %s63, %s64
    %p73 = scmp.eq.s32.totalorder %s18, 0
    %p74 = por %p72, %p73
    %p75 = scmp.ne.s32.totalorder %s63, %s64
    %p76 = scmp.eq.s32.totalorder %s19, 1
    %p77 = por %p75, %p76
    %p79 = scmp.ne.s32.totalorder %s64, %s78
    %p80 = scmp.eq.s32.totalorder %s19, 0
    %p81 = por %p79, %p80
    %s83 = sadd.s32 %s82, 1
    %p86 = scmp.eq.s32.totalorder %s13, 1
    %p87 = scmp.ne.s32.totalorder %s82, %s84
    %p88 = scmp.eq.s32.totalorder %s13, 0
    %p89 = por %p87, %p88
    %p90 = scmp.ne.s32.totalorder %s82, %s84
    %p91 = scmp.eq.s32.totalorder %s18, 1
    %p92 = por %p90, %p91
    %p93 = scmp.ne.s32.totalorder %s84, %s85
    %p94 = scmp.eq.s32.totalorder %s18, 0
    %p95 = por %p93, %p94
    %p96 = scmp.ne.s32.totalorder %s84, %s85
    %p97 = scmp.eq.s32.totalorder %s19, 1
    %p98 = por %p96, %p97
    %p100 = scmp.ne.s32.totalorder %s85, %s99
    %p101 = scmp.eq.s32.totalorder %s19, 0
    %p102 = por %p100, %p101
    %s104 = sadd.s32 %s103, 1
    %p107 = scmp.eq.s32.totalorder %s13, 1
    %p108 = scmp.ne.s32.totalorder %s103, %s105
    %p109 = scmp.eq.s32.totalorder %s13, 0
    %p110 = por %p108, %p109
    %p111 = scmp.ne.s32.totalorder %s103, %s105
    %p112 = scmp.eq.s32.totalorder %s18, 1
    %p113 = por %p111, %p112
    %p114 = scmp.ne.s32.totalorder %s105, %s106
    %p115 = scmp.eq.s32.totalorder %s18, 0
    %p116 = por %p114, %p115
    %p117 = scmp.ne.s32.totalorder %s105, %s106
    %p118 = scmp.eq.s32.totalorder %s19, 1
    %p119 = por %p117, %p118
    %p121 = scmp.ne.s32.totalorder %s106, %s120
    %p122 = scmp.eq.s32.totalorder %s19, 0
    %p123 = por %p121, %p122
    %s125 = sadd.s32 %s124, 1
    %p128 = scmp.eq.s32.totalorder %s13, 1
    %p129 = scmp.ne.s32.totalorder %s124, %s126
    %p130 = scmp.eq.s32.totalorder %s13, 0
    %p131 = por %p129, %p130
    %p132 = scmp.ne.s32.totalorder %s124, %s126
    %p133 = scmp.eq.s32.totalorder %s18, 1
    %p134 = por %p132, %p133
    %p135 = scmp.ne.s32.totalorder %s126, %s127
    %p136 = scmp.eq.s32.totalorder %s18, 0
    %p137 = por %p135, %p136
    %p138 = scmp.ne.s32.totalorder %s126, %s127
    %p139 = scmp.eq.s32.totalorder %s19, 1
    %p140 = por %p138, %p139
    %p142 = scmp.ne.s32.totalorder %s127, %s141
    %p143 = scmp.eq.s32.totalorder %s19, 0
    %p144 = por %p142, %p143
    %s146 = sadd.s32 %s145, 1
    %p149 = scmp.eq.s32.totalorder %s13, 1
    %p150 = scmp.ne.s32.totalorder %s145, %s147
    %p151 = scmp.eq.s32.totalorder %s13, 0
    %p152 = por %p150, %p151
    %p153 = scmp.ne.s32.totalorder %s145, %s147
    %p154 = scmp.eq.s32.totalorder %s18, 1
    %p155 = por %p153, %p154
    %p156 = scmp.ne.s32.totalorder %s147, %s148
    %p157 = scmp.eq.s32.totalorder %s18, 0
    %p158 = por %p156, %p157
    %p159 = scmp.ne.s32.totalorder %s147, %s148
    %p160 = scmp.eq.s32.totalorder %s19, 1
    %p161 = por %p159, %p160
    %p163 = scmp.ne.s32.totalorder %s148, %s162
    %p164 = scmp.eq.s32.totalorder %s19, 0
    %p165 = por %p163, %p164
    %s167 = sadd.s32 %s166, 1
    %p170 = scmp.eq.s32.totalorder %s13, 1
    %p171 = scmp.ne.s32.totalorder %s166, %s168
    %p172 = scmp.eq.s32.totalorder %s13, 0
    %p173 = por %p171, %p172
    %p174 = scmp.ne.s32.totalorder %s166, %s168
    %p175 = scmp.eq.s32.totalorder %s18, 1
    %p176 = por %p174, %p175
    %p177 = scmp.ne.s32.totalorder %s168, %s169
    %p178 = scmp.eq.s32.totalorder %s18, 0
    %p179 = por %p177, %p178
    %p180 = scmp.ne.s32.totalorder %s168, %s169
    %p181 = scmp.eq.s32.totalorder %s19, 1
    %p182 = por %p180, %p181
    %p184 = scmp.ne.s32.totalorder %s169, %s183
    %p185 = scmp.eq.s32.totalorder %s19, 0
    %p186 = por %p184, %p185
    %s187 = ssub.s32 %s20, %s32
    %s188 = ssub.s32 %s21, %s28
    %s189 = sor.u32 %s187, %s188
    %p190 = scmp.eq.s32.totalorder %s189, 0
    %s192 = sadd.s32 %s191, 1
    %s193 = scalar_select %p190, %s191, %s192
    %p196 = pneg %p190
    %p197 = scmp.eq.s32.totalorder %s13, 1
    %p198 = por %p196, %p197
    %p199 = scmp.ne.s32.totalorder %s191, %s194
    %p200 = scmp.eq.s32.totalorder %s13, 0
    %p201 = por %p199, %p200
    %p202 = scmp.ne.s32.totalorder %s191, %s194
    %p203 = scmp.eq.s32.totalorder %s18, 1
    %p204 = por %p202, %p203
    %p205 = scmp.ne.s32.totalorder %s194, %s195
    %p206 = scmp.eq.s32.totalorder %s18, 0
    %p207 = por %p205, %p206
    %p208 = scmp.ne.s32.totalorder %s194, %s195
    %p209 = scmp.eq.s32.totalorder %s19, 1
    %p210 = por %p208, %p209
    %p212 = scmp.ne.s32.totalorder %s195, %s211
    %p213 = scmp.eq.s32.totalorder %s19, 0
    %p214 = por %p212, %p213
    %p215 = scmp.le.s32.totalorder 1, %s13
    %p216 = scmp.lt.s32.totalorder %s13, 3
    %p217 = pnand %p215, %p216
    %p218 = pneg %p217
    // Predicated region
    $region9: #{pixel_discriminator_forward.3} parent=5 // pred_check
      _
    $region10: #{pixel_discriminator_forward.3} parent=5 // pred_check_branch
      %220 = sbr.rel (%p217) target = $region12
    $region11: #{pixel_discriminator_forward.3} parent=5 // pred_region
      %s221 = ssub.s32 %s13, 1
      // Predicated region
      $region13: #{pixel_discriminator_forward.3} parent=11 // pred_check
        %p222 = pneg %p74
      $region14: #{pixel_discriminator_forward.3} parent=11 // pred_check_branch
        %224 = sbr.rel (%p222) target = $region16
      $region15: #{pixel_discriminator_forward.3} parent=11 // pred_region
        _
      $region16: #{pixel_discriminator_forward.3} parent=11 // pred_fallthru
        _
      // Predicated region
      $region17: #{pixel_discriminator_forward.3} parent=11 // pred_check
        %p225 = pneg %p95
      $region18: #{pixel_discriminator_forward.3} parent=11 // pred_check_branch
        %227 = sbr.rel (%p225) target = $region20
      $region19: #{pixel_discriminator_forward.3} parent=11 // pred_region
        _
      $region20: #{pixel_discriminator_forward.3} parent=11 // pred_fallthru
        _
      // Predicated region
      $region21: #{pixel_discriminator_forward.3} parent=11 // pred_check
        %p228 = pneg %p116
      $region22: #{pixel_discriminator_forward.3} parent=11 // pred_check_branch
        %230 = sbr.rel (%p228) target = $region24
      $region23: #{pixel_discriminator_forward.3} parent=11 // pred_region
        _
      $region24: #{pixel_discriminator_forward.3} parent=11 // pred_fallthru
        _
      // Predicated region
      $region25: #{pixel_discriminator_forward.3} parent=11 // pred_check
        %p231 = pneg %p137
      $region26: #{pixel_discriminator_forward.3} parent=11 // pred_check_branch
        %233 = sbr.rel (%p231) target = $region28
      $region27: #{pixel_discriminator_forward.3} parent=11 // pred_region
        _
      $region28: #{pixel_discriminator_forward.3} parent=11 // pred_fallthru
        _
      // Predicated region
      $region29: #{pixel_discriminator_forward.3} parent=11 // pred_check
        %p234 = pneg %p158
      $region30: #{pixel_discriminator_forward.3} parent=11 // pred_check_branch
        %236 = sbr.rel (%p234) target = $region32
      $region31: #{pixel_discriminator_forward.3} parent=11 // pred_region
        _
      $region32: #{pixel_discriminator_forward.3} parent=11 // pred_fallthru
        _
      // Predicated region
      $region33: #{pixel_discriminator_forward.3} parent=11 // pred_check
        %p237 = pneg %p179
      $region34: #{pixel_discriminator_forward.3} parent=11 // pred_check_branch
        %239 = sbr.rel (%p237) target = $region36
      $region35: #{pixel_discriminator_forward.3} parent=11 // pred_region
        _
      $region36: #{pixel_discriminator_forward.3} parent=11 // pred_fallthru
        _
    $region12: #{pixel_discriminator_forward.3} parent=5 // pred_fallthru
      _
    %p240 = scmp.lt.s32.totalorder %s13, 2
    // Predicated region
    $region37: #{pixel_discriminator_forward.3} parent=5 // pred_check
      %p241 = pneg %p240
    $region38: #{pixel_discriminator_forward.3} parent=5 // pred_check_branch
      %243 = sbr.rel (%p241) target = $region40
    $region39: #{pixel_discriminator_forward.3} parent=5 // pred_region
      // Predicated region
      $region41: #{pixel_discriminator_forward.3} parent=39 // pred_check
        %p244 = pneg %p47
      $region42: #{pixel_discriminator_forward.3} parent=39 // pred_check_branch
        %246 = sbr.rel (%p244) target = $region44
      $region43: #{pixel_discriminator_forward.3} parent=39 // pred_region
        %s247 = smul.u32 2, %s21
        %p248 = scmp.lt.s32.totalorder %s20, 1
        %s249 = scalar_select %p248, %s20, 1
        %p250 = scmp.lt.s32.totalorder %s247, 1
        %s251 = scalar_select %p250, %s247, 1
        %s252 = smul.addr %s249, 2
        %s253 = sadd.s32 %s251, %s252
        %s254 = smul.addr %s253, 4
        %s255 = scalar_lea.vmem %s0, %s254
        %s256 = smul.u32 2, %s21
      $region44: #{pixel_discriminator_forward.3} parent=39 // pred_fallthru
        _
    $region40: #{pixel_discriminator_forward.3} parent=5 // pred_fallthru
      _
    %p257 = scmp.le.s32.totalorder 1, %s13
    %p258 = scmp.lt.s32.totalorder %s13, 3
    %p259 = pnand %p257, %p258
    %p260 = pneg %p259
    // Predicated region
    $region45: #{pixel_discriminator_forward.3} parent=5 // pred_check
      _
    $region46: #{pixel_discriminator_forward.3} parent=5 // pred_check_branch
      %262 = sbr.rel (%p259) target = $region48
    $region47: #{pixel_discriminator_forward.3} parent=5 // pred_region
      %s263 = ssub.s32 %s13, 1
      %s264 = smul.u32 2, %s23
      %p265 = scmp.lt.s32.totalorder %s22, 1
      %s266 = scalar_select %p265, %s22, 1
      %p267 = scmp.lt.s32.totalorder %s264, 1
      %s268 = scalar_select %p267, %s264, 1
      %s269 = smul.addr %s266, 2
      %s270 = sadd.s32 %s268, %s269
      %s271 = smul.addr %s270, 4
      %s272 = scalar_lea.vmem %s0, %s271
      %p273 = pneg %p53
      %p274 = pneg %p50
      %p275 = pneg %p74
      %p276 = pneg %p71
      %p277 = pneg %p95
      %p278 = pneg %p92
      %p279 = pneg %p116
      %p280 = pneg %p113
      %p281 = pneg %p137
      %p282 = pneg %p134
      %p283 = pneg %p158
      %p284 = pneg %p155
      %p285 = pneg %p179
      %p286 = pneg %p176
      %p287 = pneg %p207
      %p288 = pneg %p204
      %s289 = smul.u32 2, %s23
      %p290 = scmp.lt.s32.totalorder %s22, 1
      %s291 = scalar_select %p290, %s22, 1
      %p292 = scmp.lt.s32.totalorder %s289, 1
      %s293 = scalar_select %p292, %s289, 1
      %s294 = smul.addr %s291, 2
      %s295 = sadd.s32 %s293, %s294
      %s296 = scalar_lea.vmem %s7, %s295
      %s297 = smul.u32 2, %s23
      %p298 = scmp.lt.s32.totalorder %s22, 1
      %s299 = scalar_select %p298, %s22, 1
      %p300 = scmp.lt.s32.totalorder %s297, 1
      %s301 = scalar_select %p300, %s297, 1
      %s302 = smul.addr %s299, 2
      %s303 = sadd.s32 %s301, %s302
      %s304 = smul.addr %s303, 4
      %s305 = scalar_lea.vmem %s0, %s304
      %s306 = smul.u32 2, %s23
      %s307 = smul.u32 2, %s23
      %p308 = scmp.lt.s32.totalorder %s22, 1
      %s309 = scalar_select %p308, %s22, 1
      %p310 = scmp.lt.s32.totalorder %s307, 1
      %s311 = scalar_select %p310, %s307, 1
      %s312 = smul.addr %s309, 2
      %s313 = sadd.s32 %s311, %s312
      %s314 = scalar_lea.vmem %s7, %s313
      %s315 = smul.u32 2, %s23
      %v317 = vld [vmem:[%s305] sm:$0xff]
      %v319 = vcombine.high %v317, %v317
      %v321 = vpack.c.bf16 %v317, %v317
      %v322 = vpack.c.bf16 %v319, %v319
      %v323 = vld [vmem:[%s1] sm:$0xf]
      %v324 = vld [vmem:[%s1 + $0x4] sm:$0xf]
      %v325 = vld [vmem:[%s2] sm:$0xff]
      %v326 = vld [vmem:[%s2 + $0x8] sm:$0xff]
      %328 = vset.pattern.permute.xlu0 0
      %329 = vperm.xlu0 %328, %v325
      %v330 = vpop.permute.xlu0 %329
      %333 = vset.pattern.permute.xlu0 0
      %334 = vperm.xlu0 %333, %v326
      %v335 = vpop.permute.xlu0 %334
      %v339 = vunpack.c.l.b16 %v323
      %v340 = vunpack.c.l.b16 %v324
      %v341 = vpack.c.b16 %v340, %v339
      %vm342 = vcmask 31744
      %v344 = vsel %vm342, %v341, 0
      %vm346 = vcmask 1041408
      %v348 = vsel %vm346, %v321, 0
      %v351 = vsel %vm346, %v322, 0
      %353 = vmatprep.subr.bf16.mxu0 %v351
      %354 = vmatpush1.bf16.msra.mxu0 %v348
      %355 = vmatprep.subr.bf16.mxu0 0
      %356 = vmatpush1.bf16.msra.mxu0 0
      %357 = vmatprep.subr.bf16.mxu0 0
      %358 = vmatpush1.bf16.msra.mxu0 0
      %359 = vmatprep.subr.bf16.mxu0 0
      %360 = vmatpush1.bf16.msra.mxu0 0
      %361 = vmatprep.subr.bf16.mxu0 0
      %362 = vmatpush1.bf16.msra.mxu0 0
      %363 = vmatprep.subr.bf16.mxu0 0
      %364 = vmatpush1.bf16.msra.mxu0 0
      %365 = vmatprep.subr.bf16.mxu0 0
      %366 = vmatpush1.bf16.msra.mxu0 0
      %367 = vmatprep.subr.bf16.mxu0 0
      %368 = vmatpush1.bf16.msra.mxu0 0
      %369 = vmatprep.subr.bf16.mxu0 0
      %370 = vmatpush1.bf16.msra.mxu0 0
      %371 = vmatprep.subr.bf16.mxu0 0
      %372 = vmatpush1.bf16.msra.mxu0 0
      %373 = vmatprep.subr.bf16.mxu0 0
      %374 = vmatpush1.bf16.msra.mxu0 0
      %375 = vmatprep.subr.bf16.mxu0 0
      %376 = vmatpush1.bf16.msra.mxu0 0
      %377 = vmatprep.subr.bf16.mxu0 0
      %378 = vmatpush1.bf16.msra.mxu0 0
      %379 = vmatprep.subr.bf16.mxu0 0
      %380 = vmatpush1.bf16.msra.mxu0 0
      %381 = vmatprep.subr.bf16.mxu0 0
      %382 = vmatpush1.bf16.msra.mxu0 0
      %383 = vmatprep.subr.bf16.mxu0 0
      %384 = vmatpush1.bf16.msra.mxu0 0
      %385 = vmatprep.mubr.bf16.mxu0 0
      %386 = vmatmul.mubr.bf16.gmra.mrb[0].mxu0 %v344
      %v387 = vpop.f32.mrb[0].mxu0
      %v388 = vadd.f32 %v330, %v387
      %v389 = vpop.f32.mrb[0].mxu0
      %v390 = vadd.f32 %v330, %v389
      %v391 = vpop.f32.mrb[0].mxu0
      %v392 = vadd.f32 %v335, %v391
      %v393 = vpop.f32.mrb[0].mxu0
      %v394 = vadd.f32 %v335, %v393
      %395 = vdwg.mxu0
      %vm396 = vcmp.ge.f32.partialorder %v388, 0.0
      %vm397 = vcmp.ge.f32.partialorder %v390, 0.0
      %vm398 = vcmp.ge.f32.partialorder %v392, 0.0
      %vm399 = vcmp.ge.f32.partialorder %v394, 0.0
      %v400 = vmul.f32 %v388, 0.2
      %v401 = vmul.f32 %v390, 0.2
      %v402 = vmul.f32 %v392, 0.2
      %v403 = vmul.f32 %v394, 0.2
      %v404 = vsel %vm396, %v388, %v400
      %v405 = vsel %vm397, %v390, %v401
      %v406 = vsel %vm398, %v392, %v402
      %v407 = vsel %vm399, %v394, %v403
      %v408 = vld [vmem:[%s3] sm:$0xf]
      %v409 = vld [vmem:[%s3 + $0x4] sm:$0xf]
      %v410 = vld [vmem:[%s3 + $0x8] sm:$0xf]
      %v411 = vld [vmem:[%s3 + $0xc] sm:$0xf]
      %v412 = vpack.c.bf16 %v406, %v404
      %v413 = vpack.c.bf16 %v407, %v405
      %v418 = vunpack.c.l.b16 %v408
      %v419 = vunpack.c.l.b16 %v409
      %v420 = vunpack.c.l.b16 %v410
      %v421 = vunpack.c.l.b16 %v411
      %v422 = vpack.c.b16 %v419, %v418
      %v423 = vpack.c.b16 %v421, %v420
      %vm424 = vcmask 130048
      %v426 = vsel %vm424, %v422, 0
      %v429 = vsel %vm424, %v423, 0
      %431 = vmatprep.subr.bf16.mxu0 %v413
      %432 = vmatpush1.bf16.msra.mxu0 %v412
      %433 = vmatprep.subr.bf16.mxu0 0
      %434 = vmatpush1.bf16.msra.mxu0 0
      %435 = vmatprep.subr.bf16.mxu0 0
      %436 = vmatpush1.bf16.msra.mxu0 0
      %437 = vmatprep.subr.bf16.mxu0 0
      %438 = vmatpush1.bf16.msra.mxu0 0
      %439 = vmatprep.subr.bf16.mxu0 0
      %440 = vmatpush1.bf16.msra.mxu0 0
      %441 = vmatprep.subr.bf16.mxu0 0
      %442 = vmatpush1.bf16.msra.mxu0 0
      %443 = vmatprep.subr.bf16.mxu0 0
      %444 = vmatpush1.bf16.msra.mxu0 0
      %445 = vmatprep.subr.bf16.mxu0 0
      %446 = vmatpush1.bf16.msra.mxu0 0
      %447 = vmatprep.subr.bf16.mxu0 0
      %448 = vmatpush1.bf16.msra.mxu0 0
      %449 = vmatprep.subr.bf16.mxu0 0
      %450 = vmatpush1.bf16.msra.mxu0 0
      %451 = vmatprep.subr.bf16.mxu0 0
      %452 = vmatpush1.bf16.msra.mxu0 0
      %453 = vmatprep.subr.bf16.mxu0 0
      %454 = vmatpush1.bf16.msra.mxu0 0
      %455 = vmatprep.subr.bf16.mxu0 0
      %456 = vmatpush1.bf16.msra.mxu0 0
      %457 = vmatprep.subr.bf16.mxu0 0
      %458 = vmatpush1.bf16.msra.mxu0 0
      %459 = vmatprep.subr.bf16.mxu0 0
      %460 = vmatpush1.bf16.msra.mxu0 0
      %461 = vmatprep.subr.bf16.mxu0 0
      %462 = vmatpush1.bf16.msra.mxu0 0
      %463 = vmatprep.mubr.bf16.mxu0 0
      %464 = vmatmul.mubr.bf16.gmra.mrb[0].mxu0 %v426
      %v465 = vpop.f32.mrb[0].mxu0
      %v466 = vadd.f32 0.0, %v465
      %v467 = vpop.f32.mrb[0].mxu0
      %v468 = vadd.f32 0.0, %v467
      %v469 = vpop.f32.mrb[0].mxu0
      %v470 = vadd.f32 0.0, %v469
      %v471 = vpop.f32.mrb[0].mxu0
      %v472 = vadd.f32 0.0, %v471
      %473 = vmatprep.mubr.bf16.mxu0 0
      %474 = vmatmul.mubr.bf16.gmra.mrb[0].mxu0 %v429
      %v475 = vpop.f32.mrb[0].mxu0
      %v476 = vadd.f32 0.0, %v475
      %v477 = vpop.f32.mrb[0].mxu0
      %v478 = vadd.f32 0.0, %v477
      %v479 = vpop.f32.mrb[0].mxu0
      %v480 = vadd.f32 0.0, %v479
      %v481 = vpop.f32.mrb[0].mxu0
      %v482 = vadd.f32 0.0, %v481
      %483 = vdwg.mxu0
      %v484 = vld [vmem:[%s4] sm:$0xff]
      %v485 = vld [vmem:[%s4 + $0x8] sm:$0xff]
      %v486 = vld [vmem:[%s4 + $0x10] sm:$0xff]
      %v487 = vld [vmem:[%s4 + $0x18] sm:$0xff]
      %489 = vset.pattern.permute.xlu0 0
      %490 = vperm.xlu0 %489, %v484
      %v491 = vpop.permute.xlu0 %490
      %494 = vset.pattern.permute.xlu0 0
      %495 = vperm.xlu0 %494, %v485
      %v496 = vpop.permute.xlu0 %495
      %499 = vset.pattern.permute.xlu0 0
      %500 = vperm.xlu0 %499, %v486
      %v501 = vpop.permute.xlu0 %500
      %504 = vset.pattern.permute.xlu0 0
      %505 = vperm.xlu0 %504, %v487
      %v506 = vpop.permute.xlu0 %505
      %v508 = vmul.f32 %v466, %v491
      %v509 = vmul.f32 %v468, %v491
      %v510 = vmul.f32 %v470, %v496
      %v511 = vmul.f32 %v472, %v496
      %v512 = vmul.f32 %v476, %v501
      %v513 = vmul.f32 %v478, %v501
      %v514 = vmul.f32 %v480, %v506
      %v515 = vmul.f32 %v482, %v506
      %v516 = vld [vmem:[%s5] sm:$0xff]
      %v517 = vld [vmem:[%s5 + $0x8] sm:$0xff]
      %v518 = vld [vmem:[%s5 + $0x10] sm:$0xff]
      %v519 = vld [vmem:[%s5 + $0x18] sm:$0xff]
      %521 = vset.pattern.permute.xlu0 0
      %522 = vperm.xlu0 %521, %v516
      %v523 = vpop.permute.xlu0 %522
      %526 = vset.pattern.permute.xlu0 0
      %527 = vperm.xlu0 %526, %v517
      %v528 = vpop.permute.xlu0 %527
      %531 = vset.pattern.permute.xlu0 0
      %532 = vperm.xlu0 %531, %v518
      %v533 = vpop.permute.xlu0 %532
      %536 = vset.pattern.permute.xlu0 0
      %537 = vperm.xlu0 %536, %v519
      %v538 = vpop.permute.xlu0 %537
      %v540 = vadd.f32 %v508, %v523
      %v541 = vadd.f32 %v509, %v523
      %v542 = vadd.f32 %v510, %v528
      %v543 = vadd.f32 %v511, %v528
      %v544 = vadd.f32 %v512, %v533
      %v545 = vadd.f32 %v513, %v533
      %v546 = vadd.f32 %v514, %v538
      %v547 = vadd.f32 %v515, %v538
      %vm548 = vcmp.ge.f32.partialorder %v540, 0.0
      %vm549 = vcmp.ge.f32.partialorder %v541, 0.0
      %vm550 = vcmp.ge.f32.partialorder %v542, 0.0
      %vm551 = vcmp.ge.f32.partialorder %v543, 0.0
      %vm552 = vcmp.ge.f32.partialorder %v544, 0.0
      %vm553 = vcmp.ge.f32.partialorder %v545, 0.0
      %vm554 = vcmp.ge.f32.partialorder %v546, 0.0
      %vm555 = vcmp.ge.f32.partialorder %v547, 0.0
      %v556 = vmul.f32 %v540, 0.2
      %v557 = vmul.f32 %v541, 0.2
      %v558 = vmul.f32 %v542, 0.2
      %v559 = vmul.f32 %v543, 0.2
      %v560 = vmul.f32 %v544, 0.2
      %v561 = vmul.f32 %v545, 0.2
      %v562 = vmul.f32 %v546, 0.2
      %v563 = vmul.f32 %v547, 0.2
      %v564 = vsel %vm548, %v540, %v556
      %v565 = vsel %vm549, %v541, %v557
      %v566 = vsel %vm550, %v542, %v558
      %v567 = vsel %vm551, %v543, %v559
      %v568 = vsel %vm552, %v544, %v560
      %v569 = vsel %vm553, %v545, %v561
      %v570 = vsel %vm554, %v546, %v562
      %v571 = vsel %vm555, %v547, %v563
      %v572 = vld [vmem:[%s6] sm:$0xff]
      %v573 = vld [vmem:[%s6 + $0x8] sm:$0xff]
      %v574 = vld [vmem:[%s6 + $0x10] sm:$0xff]
      %v575 = vld [vmem:[%s6 + $0x18] sm:$0xff]
      %577 = vset.pattern.permute.xlu0 0
      %578 = vperm.xlu0 %577, %v572
      %v579 = vpop.permute.xlu0 %578
      %582 = vset.pattern.permute.xlu0 0
      %583 = vperm.xlu0 %582, %v573
      %v584 = vpop.permute.xlu0 %583
      %587 = vset.pattern.permute.xlu0 0
      %588 = vperm.xlu0 %587, %v574
      %v589 = vpop.permute.xlu0 %588
      %592 = vset.pattern.permute.xlu0 0
      %593 = vperm.xlu0 %592, %v575
      %v594 = vpop.permute.xlu0 %593
      %v596 = vmul.f32 %v564, %v579
      %v597 = vmul.f32 %v565, %v579
      %v598 = vmul.f32 %v566, %v584
      %v599 = vmul.f32 %v567, %v584
      %v600 = vmul.f32 %v568, %v589
      %v601 = vmul.f32 %v569, %v589
      %v602 = vmul.f32 %v570, %v594
      %v603 = vmul.f32 %v571, %v594
      %v604 = vadd.f32 %v596, %v598
      %v605 = vadd.f32 %v604, %v600
      %v606 = vadd.f32 %v605, %v602
      %v607 = vrot.slane %v606, 4
      %v608 = vadd.f32 %v606, %v607
      %v609 = vrot.slane %v608, 2
      %v610 = vadd.f32 %v608, %v609
      %v611 = vrot.slane %v610, 1
      %v612 = vadd.f32 %v610, %v611
      %v613 = vadd.f32 %v597, %v599
      %v614 = vadd.f32 %v613, %v601
      %v615 = vadd.f32 %v614, %v603
      %v616 = vrot.slane %v615, 4
      %v617 = vadd.f32 %v615, %v616
      %v618 = vrot.slane %v617, 2
      %v619 = vadd.f32 %v617, %v618
      %v620 = vrot.slane %v619, 1
      %v621 = vadd.f32 %v619, %v620
      %v624 = vcombine.low %v612, %v621
      %v626 = vunpack.c.l.s4 1966171168
      %v627 = vunpack.c.0.s8 %v626
      %v628 = vlaneseq
      %v629 = vshrl.u32 %v628, 7
      %v630 = vsub.s32 %v627, %v629
      %v631 = vrot.slane %v624, %v630
      %v633 = vunpack.c.l.s4 1966171168
      %v634 = vunpack.c.0.s8 %v633
      %v635 = vlaneseq
      %v636 = vshrl.u32 %v635, 7
      %v637 = vsub.s32 %v634, %v636
      %v638 = vrot.slane %v631, %v637
      %v640 = vlaneseq
      %vm641 = vcmp.ge.s32.totalorder %v640, 0
      %vm642 = vcmp.lt.s32.totalorder %v640, 256
      %vm643 = vmand %vm641, %vm642
      %644 = vst.msk [vmem:[%s314] sm:$0x3] %vm643, %v638
      %s645 = smul.u32 2, %s23
      %p646 = scmp.lt.s32.totalorder %s22, 1
      %s647 = scalar_select %p646, %s22, 1
      %p648 = scmp.lt.s32.totalorder %s645, 1
      %s649 = scalar_select %p648, %s645, 1
      %s650 = smul.addr %s647, 2
      %s651 = sadd.s32 %s649, %s650
      %s652 = scalar_lea.vmem %s7, %s651
      // Predicated region
      $region49: #{pixel_discriminator_forward.3} parent=47 // pred_check
        %p653 = pneg %p204
      $region50: #{pixel_discriminator_forward.3} parent=47 // pred_check_branch
        %655 = sbr.rel (%p653) target = $region52
      $region51: #{pixel_discriminator_forward.3} parent=47 // pred_region
        %s656 = smul.u32 2, %s23
      $region52: #{pixel_discriminator_forward.3} parent=47 // pred_fallthru
        _
    $region48: #{pixel_discriminator_forward.3} parent=5 // pred_fallthru
      _
    %p657 = scmp.le.s32.totalorder 2, %s13
    // Predicated region
    $region53: #{pixel_discriminator_forward.3} parent=5 // pred_check
      %p658 = pneg %p657
    $region54: #{pixel_discriminator_forward.3} parent=5 // pred_check_branch
      %660 = sbr.rel (%p658) target = $region56
    $region55: #{pixel_discriminator_forward.3} parent=5 // pred_region
      %s661 = ssub.s32 %s13, 2
      // Predicated region
      $region57: #{pixel_discriminator_forward.3} parent=55 // pred_check
        %p662 = pneg %p210
      $region58: #{pixel_discriminator_forward.3} parent=55 // pred_check_branch
        %664 = sbr.rel (%p662) target = $region60
      $region59: #{pixel_discriminator_forward.3} parent=55 // pred_region
        %s665 = smul.u32 2, %s25
        %p666 = scmp.lt.s32.totalorder %s24, 1
        %s667 = scalar_select %p666, %s24, 1
        %p668 = scmp.lt.s32.totalorder %s665, 1
        %s669 = scalar_select %p668, %s665, 1
        %s670 = smul.addr %s667, 2
        %s671 = sadd.s32 %s669, %s670
        %s672 = scalar_lea.vmem %s7, %s671
      $region60: #{pixel_discriminator_forward.3} parent=55 // pred_fallthru
        _
    $region56: #{pixel_discriminator_forward.3} parent=5 // pred_fallthru
      _
  $region6: #{pixel_discriminator_forward.3} parent=0 // loop_footer
    %s17 = sadd.s32 1, %s13
  $region7: #{pixel_discriminator_forward.3} parent=0 // loop_footer_branch
    %12 = sbr.rel target = $region3
  $region8: #{pixel_discriminator_forward.3} parent=0 // loop_exit
    _

</llo_original>
